<compile_context>
chip_gen: v6e
topology: v6e:2x2x1
jax: 0.10.0
libtpu: 0.0.40
codegen_flags: <defaults>
</compile_context>

<pallas_src>
import functools

import jax
import jax.numpy as jnp
from jax.experimental import pallas as pl
from jax.experimental.pallas import tpu as pltpu

EPS = 1e-5


def conv_stats_kernel(x_ref, b_ref, yc_ref, stat_ref, acc_ref):
    # x_ref:    (1, Hp, Kp)         whole padded image of batch element n, f32
    #                               (lane dim Kp = Wp*Cin zero-padded to 128k)
    # b_ref:    (3, Kp, W*Cout)     banded conv weights (one slab per kh tap), bf16
    # yc_ref:   (1, tile_h, W*Cout) conv output tile (lane-dense), bf16
    # stat_ref: (1, 1, 2, W*Cout)   per-tile [sum; sum-of-squares], f32
    # acc_ref:  (tile_h, W*Cout)    f32 VMEM accumulator (bounds vreg pressure
    #                               when tile_h is large)
    h = pl.program_id(1)
    tile_h = yc_ref.shape[1]
    wcout = yc_ref.shape[2]

    r0 = pl.multiple_of(h * tile_h, tile_h)
    # One aligned f32 load of the tile's row window (+2 halo rows); the three kh
    # taps are static sublane-shifted views cast to bf16 right before the MXU.
    rows = x_ref[0, pl.ds(r0, tile_h + 2), :]                   # (tile_h+2, Kp)

    acc_ref[...] = jnp.dot(rows[0:tile_h, :].astype(b_ref.dtype), b_ref[0],
                           preferred_element_type=jnp.float32)
    for kh in (1, 2):                                           # unrolled: 3 MXU pushes
        acc_ref[...] += jnp.dot(rows[kh:kh + tile_h, :].astype(b_ref.dtype),
                                b_ref[kh], preferred_element_type=jnp.float32)
    # Conv bias omitted on purpose: training-mode BN subtracts the batch mean,
    # which cancels a per-channel bias exactly (see wrapper docstring).

    acc = acc_ref[...]
    yc_ref[...] = acc.reshape(1, tile_h, wcout).astype(yc_ref.dtype)

    # Partial BatchNorm statistics (per lane == per (w, cout) pair); two direct
    # sliced stores, no concatenate/relayout in the epilogue.
    stat_ref[0, 0, 0:1, :] = jnp.sum(acc, axis=0, keepdims=True)
    stat_ref[0, 0, 1:2, :] = jnp.sum(acc * acc, axis=0, keepdims=True)


@functools.partial(jax.jit, static_argnames=("tile_h", "compute_dtype"))
def conv_bn_relu_drop(x_nchw, w_oihw, bias, gamma, beta, *, tile_h=None,
                      compute_dtype=jnp.bfloat16):
    """Forward of ConvBnReluDrop: (N, Cin, H, W) -> (N, Cout, H, W).

    The conv bias is dropped on purpose: under training-mode (batch-statistics)
    BatchNorm a per-channel bias cancels exactly in (y - mean).  This is only
    valid for the module's training forward with has_bn=True; an eval /
    running-stats path must add the bias back.
    """
    del bias
    N, Cin, H, W = x_nchw.shape
    Cout = w_oihw.shape[0]
    Hp, Wp = H + 2, W + 2
    wcout = W * Cout
    # Lane-dense assumption: W*Cout should be a multiple of 128; otherwise the
    # conv-output stores become masked (perf cliff, not a correctness issue).

    if tile_h is None:
        tile_h = H if H <= 256 else 256
    tile_h = min(tile_h, H)
    if tile_h < H:
        assert H % tile_h == 0 and tile_h % 16 == 0, \
            "row tiling expects H % tile_h == 0 and tile_h % 16 == 0"
    num_h = H // tile_h

    # ---- layout glue (one XLA pass over x): NCHW -> padded NHWC, (W, Cin) fused,
    #      fused K dim zero-padded to a multiple of 128 for unmasked lane loads ----
    k_raw = Wp * Cin
    Kp = pl.cdiv(k_raw, 128) * 128
    x_flat = jnp.pad(jnp.transpose(x_nchw, (0, 2, 3, 1)).astype(jnp.float32),
                     ((0, 0), (1, 1), (1, 1), (0, 0))).reshape(N, Hp, k_raw)
    if Kp != k_raw:
        x_flat = jnp.pad(x_flat, ((0, 0), (0, 0), (0, Kp - k_raw)))
    # TODO(synk): for very large H/W, replace the whole-padded-image x block with
    # row-tiled halo DMA (manual make_async_copy) so VMEM stays O(tile_h) on
    # v7x's 64 MiB VMEM, and switch the banded slab to im2col (K = 9*Cin).

    # ---- banded ("Toeplitz over W") conv weights: (3, Kp, W*Cout) ----
    # b[kh, wp*Cin + ci, w*Cout + co] = w[co, ci, kh, wp - w]   (0 <= wp - w < 3)
    w_taps = jnp.transpose(w_oihw, (2, 3, 1, 0)).astype(jnp.float32)  # (kh, kw, Cin, Cout)
    sel = ((jnp.arange(Wp)[:, None] - jnp.arange(W)[None, :])[..., None]
           == jnp.arange(3)[None, None, :]).astype(jnp.float32)       # (Wp, W, 3)
    b_mat = jnp.einsum("pwk,hkio->hpiwo", sel, w_taps).reshape(3, k_raw, wcout)
    if Kp != k_raw:
        b_mat = jnp.pad(b_mat, ((0, 0), (0, Kp - k_raw), (0, 0)))
    b_mat = b_mat.astype(compute_dtype)

    y_dtype = jnp.dtype(compute_dtype)      # bf16 conv buffer by default
    x_blk = Hp * Kp * 4
    b_bytes = 3 * Kp * wcout * b_mat.dtype.itemsize
    y_blk = tile_h * wcout * y_dtype.itemsize
    st_blk = 2 * wcout * 4
    vmem1 = int(min(2 * (x_blk + y_blk + st_blk + b_bytes)
                    + tile_h * wcout * 4 + (4 << 20), 40 << 20))

    # ---- pass 1 (Pallas): conv + per-tile channel sum / sum-of-squares ----
    y_conv, stats = pl.pallas_call(
        conv_stats_kernel,
        out_shape=(jax.ShapeDtypeStruct((N, H, wcout), y_dtype),
                   jax.ShapeDtypeStruct((N, num_h, 2, wcout), jnp.float32)),
        grid_spec=pltpu.PrefetchScalarGridSpec(
            num_scalar_prefetch=0,
            grid=(N, num_h),
            in_specs=[
                pl.BlockSpec((1, Hp, Kp), lambda n, h: (n, 0, 0)),
                pl.BlockSpec((3, Kp, wcout), lambda n, h: (0, 0, 0)),
            ],
            out_specs=(
                pl.BlockSpec((1, tile_h, wcout), lambda n, h: (n, h, 0)),
                pl.BlockSpec((1, 1, 2, wcout), lambda n, h: (n, h, 0, 0)),
            ),
            scratch_shapes=[pltpu.VMEM((tile_h, wcout), jnp.float32)],
        ),
        compiler_params=pltpu.CompilerParams(
            dimension_semantics=("parallel", "parallel"),
            vmem_limit_bytes=vmem1),
        cost_estimate=pl.CostEstimate(
            flops=2 * N * num_h * 3 * tile_h * Kp * wcout,
            transcendentals=0,
            bytes_accessed=N * Hp * Kp * 4 + b_bytes
                           + N * H * wcout * y_dtype.itemsize
                           + N * num_h * 2 * wcout * 4),
    )(x_flat, b_mat)

    # ---- global BN batch statistics (tiny reduction) + folded per-channel affine ----
    tot = jnp.sum(stats, axis=(0, 1)).reshape(2, W, Cout).sum(axis=1)   # (2, Cout)
    cnt = float(N * H * W)
    mean = tot[0] / cnt
    var = jnp.maximum(tot[1] / cnt - mean * mean, 0.0)   # biased var, clamped >= 0
    scale = gamma.astype(jnp.float32) * jax.lax.rsqrt(var + EPS)
    shift = beta.astype(jnp.float32) - mean * scale

    # ---- epilogue: relu(conv * scale + shift), fused by XLA into the NCHW
    #      transpose -> exactly one read of the bf16 conv buffer + one output
    #      write.  Dropout2d(p=0) is the identity.
    y = y_conv.reshape(N, H, W, Cout).astype(jnp.float32)
    out_nhwc = jnp.maximum(y * scale[None, None, None, :]
                           + shift[None, None, None, :], 0.0)
    return jnp.transpose(out_nhwc, (0, 3, 1, 2))


def reference(x_nchw, w_oihw, bias, gamma, beta):
    y = jax.lax.conv_general_dilated(
        x_nchw, w_oihw, window_strides=(1, 1), padding=((1, 1), (1, 1)),
        dimension_numbers=("NCHW", "OIHW", "NCHW"))
    y = y + bias[None, :, None, None]
    mean = jnp.mean(y, axis=(0, 2, 3), keepdims=True)
    var = jnp.mean((y - mean) ** 2, axis=(0, 2, 3), keepdims=True)
    y = (y - mean) * jax.lax.rsqrt(var + EPS)
    y = y * gamma[None, :, None, None] + beta[None, :, None, None]
    return jnp.maximum(y, 0.0)


if __name__ == "__main__":
    # Small shapes: batch=2, in_c=4, out_c=8, spatial 16x16 (W*Cout = 128 lanes).
    N, Cin, Cout, H, W = 2, 4, 8, 16, 16

    key = jax.random.PRNGKey(0)
    kx, kw, kb, kg, kbe = jax.random.split(key, 5)
    x = jax.random.normal(kx, (N, Cin, H, W), jnp.float32)

    fan_in = Cin * 3 * 3
    bound = 1.0 / (fan_in ** 0.5)
    w = jax.random.uniform(kw, (Cout, Cin, 3, 3), jnp.float32, -bound, bound)
    b = jax.random.uniform(kb, (Cout,), jnp.float32, -bound, bound)
    gamma = 1.0 + 0.1 * jax.random.normal(kg, (Cout,), jnp.float32)
    beta = 0.1 * jax.random.normal(kbe, (Cout,), jnp.float32)

    ref = jax.block_until_ready(reference(x, w, b, gamma, beta))

    # Algorithm exactness: f32-operand path matches the reference tightly.
    out_f32 = jax.block_until_ready(
        conv_bn_relu_drop(x, w, b, gamma, beta, compute_dtype=jnp.float32))
    assert out_f32.shape == (N, Cout, H, W)
    assert jnp.allclose(out_f32, ref, atol=2e-4, rtol=2e-4), \
        float(jnp.max(jnp.abs(out_f32 - ref)))

    # Performance default: bf16 MXU operands + bf16 conv buffer (f32 accumulation
    # and f32 BN stats) -> bf16-level tolerance against the exact f32 reference.
    out = jax.block_until_ready(conv_bn_relu_drop(x, w, b, gamma, beta))
    assert out.shape == (N, Cout, H, W)
    assert jnp.allclose(out, ref, atol=8e-2, rtol=8e-2), \
        float(jnp.max(jnp.abs(out - ref)))

    print("KERNEL_OK")
</pallas_src>

<mosaic_0001>
module attributes {stable_mosaic.version = 11 : i64} {
  func.func @conv_stats_kernel(%arg0: i32, %arg1: i32, %arg2: memref<1x18x128xf32, #tpu.memory_space<vmem>>, %arg3: memref<3x128x128xf32, #tpu.memory_space<vmem>>, %arg4: memref<1x16x128xf32, #tpu.memory_space<vmem>>, %arg5: memref<1x1x2x128xf32, #tpu.memory_space<vmem>>, %arg6: memref<16x128xf32, #tpu.memory_space<vmem>>) attributes {dimension_semantics = [#tpu.dimension_semantics<parallel>, #tpu.dimension_semantics<parallel>], iteration_bounds = array<i64: 2, 1>, scalar_prefetch = 0 : i64, scratch_operands = 1 : i64, tpu.core_type = #tpu.core_type<tc>, window_params = [{transform_indices = @transform_0, window_bounds = array<i64: 1, 18, 128>}, {pipeline_mode = #tpu.pipeline_mode<synchronous>, transform_indices = @transform_1, window_bounds = array<i64: 3, 128, 128>}, {transform_indices = @transform_2, window_bounds = array<i64: 1, 16, 128>}, {transform_indices = @transform_3, window_bounds = array<i64: 1, 1, 2, 128>}]} {
    %c16_i32 = arith.constant 16 : i32
    %0 = arith.muli %arg1, %c16_i32 : i32
    %1 = tpu.assume_multiple %0, 16 : i32
    %c0 = arith.constant 0 : index
    %2 = arith.index_cast %1 : i32 to index
    %c0_0 = arith.constant 0 : index
    %3 = vector.load %arg2[%c0, %2, %c0_0] : memref<1x18x128xf32, #tpu.memory_space<vmem>>, vector<1x18x128xf32>
    %4 = vector.shape_cast %3 : vector<1x18x128xf32> to vector<18x128xf32>
    %5 = vector.extract_strided_slice %4 {offsets = [0, 0], sizes = [16, 128], strides = [1, 1]} : vector<18x128xf32> to vector<16x128xf32>
    %c0_1 = arith.constant 0 : index
    %c0_2 = arith.constant 0 : index
    %c0_3 = arith.constant 0 : index
    %6 = vector.load %arg3[%c0_1, %c0_2, %c0_3] : memref<3x128x128xf32, #tpu.memory_space<vmem>>, vector<1x128x128xf32>
    %7 = vector.shape_cast %6 : vector<1x128x128xf32> to vector<128x128xf32>
    %cst = arith.constant dense<0.000000e+00> : vector<16x128xf32>
    %8 = tpu.matmul %5, %7, %cst {dimension_numbers = #tpu.dot_dimension_numbers<[1], [0], [0], [1], [0, 0, 1, 1], [], []>} : vector<16x128xf32>, vector<128x128xf32>, vector<16x128xf32> -> vector<16x128xf32>
    %c0_4 = arith.constant 0 : index
    %c0_5 = arith.constant 0 : index
    %9 = vector.load %arg6[%c0_4, %c0_5] : memref<16x128xf32, #tpu.memory_space<vmem>>, vector<16x128xf32>
    tpu.vector_store %arg6[%c0_4, %c0_5], %8 {strides = array<i32>} : memref<16x128xf32, #tpu.memory_space<vmem>>, vector<16x128xf32>,
    %c0_6 = arith.constant 0 : index
    %c0_7 = arith.constant 0 : index
    %10 = vector.load %arg6[%c0_6, %c0_7] : memref<16x128xf32, #tpu.memory_space<vmem>>, vector<16x128xf32>
    %11 = vector.extract_strided_slice %4 {offsets = [1, 0], sizes = [16, 128], strides = [1, 1]} : vector<18x128xf32> to vector<16x128xf32>
    %c1 = arith.constant 1 : index
    %c0_8 = arith.constant 0 : index
    %c0_9 = arith.constant 0 : index
    %12 = vector.load %arg3[%c1, %c0_8, %c0_9] : memref<3x128x128xf32, #tpu.memory_space<vmem>>, vector<1x128x128xf32>
    %13 = vector.shape_cast %12 : vector<1x128x128xf32> to vector<128x128xf32>
    %cst_10 = arith.constant dense<0.000000e+00> : vector<16x128xf32>
    %14 = tpu.matmul %11, %13, %cst_10 {dimension_numbers = #tpu.dot_dimension_numbers<[1], [0], [0], [1], [0, 0, 1, 1], [], []>} : vector<16x128xf32>, vector<128x128xf32>, vector<16x128xf32> -> vector<16x128xf32>
    %15 = arith.addf %10, %14 : vector<16x128xf32>
    %c0_11 = arith.constant 0 : index
    %c0_12 = arith.constant 0 : index
    %16 = vector.load %arg6[%c0_11, %c0_12] : memref<16x128xf32, #tpu.memory_space<vmem>>, vector<16x128xf32>
    tpu.vector_store %arg6[%c0_11, %c0_12], %15 {strides = array<i32>} : memref<16x128xf32, #tpu.memory_space<vmem>>, vector<16x128xf32>,
    %c0_13 = arith.constant 0 : index
    %c0_14 = arith.constant 0 : index
    %17 = vector.load %arg6[%c0_13, %c0_14] : memref<16x128xf32, #tpu.memory_space<vmem>>, vector<16x128xf32>
    %18 = vector.extract_strided_slice %4 {offsets = [2, 0], sizes = [16, 128], strides = [1, 1]} : vector<18x128xf32> to vector<16x128xf32>
    %c2 = arith.constant 2 : index
    %c0_15 = arith.constant 0 : index
    %c0_16 = arith.constant 0 : index
    %19 = vector.load %arg3[%c2, %c0_15, %c0_16] : memref<3x128x128xf32, #tpu.memory_space<vmem>>, vector<1x128x128xf32>
    %20 = vector.shape_cast %19 : vector<1x128x128xf32> to vector<128x128xf32>
    %cst_17 = arith.constant dense<0.000000e+00> : vector<16x128xf32>
    %21 = tpu.matmul %18, %20, %cst_17 {dimension_numbers = #tpu.dot_dimension_numbers<[1], [0], [0], [1], [0, 0, 1, 1], [], []>} : vector<16x128xf32>, vector<128x128xf32>, vector<16x128xf32> -> vector<16x128xf32>
    %22 = arith.addf %17, %21 : vector<16x128xf32>
    %c0_18 = arith.constant 0 : index
    %c0_19 = arith.constant 0 : index
    %23 = vector.load %arg6[%c0_18, %c0_19] : memref<16x128xf32, #tpu.memory_space<vmem>>, vector<16x128xf32>
    tpu.vector_store %arg6[%c0_18, %c0_19], %22 {strides = array<i32>} : memref<16x128xf32, #tpu.memory_space<vmem>>, vector<16x128xf32>,
    %c0_20 = arith.constant 0 : index
    %c0_21 = arith.constant 0 : index
    %24 = vector.load %arg6[%c0_20, %c0_21] : memref<16x128xf32, #tpu.memory_space<vmem>>, vector<16x128xf32>
    %25 = vector.shape_cast %24 : vector<16x128xf32> to vector<1x16x128xf32>
    %c0_22 = arith.constant 0 : index
    %c0_23 = arith.constant 0 : index
    %c0_24 = arith.constant 0 : index
    %26 = vector.load %arg4[%c0_22, %c0_23, %c0_24] : memref<1x16x128xf32, #tpu.memory_space<vmem>>, vector<1x16x128xf32>
    tpu.vector_store %arg4[%c0_22, %c0_23, %c0_24], %25 {strides = array<i32>} : memref<1x16x128xf32, #tpu.memory_space<vmem>>, vector<1x16x128xf32>,
    %cst_25 = arith.constant dense<0.000000e+00> : vector<128xf32>
    %27 = vector.multi_reduction <add>, %24, %cst_25 [0] : vector<16x128xf32> to vector<128xf32>
    %28 = vector.shape_cast %27 : vector<128xf32> to vector<1x128xf32>
    %c0_26 = arith.constant 0 : index
    %c0_27 = arith.constant 0 : index
    %c0_28 = arith.constant 0 : index
    %c0_29 = arith.constant 0 : index
    %29 = vector.load %arg5[%c0_26, %c0_27, %c0_28, %c0_29] : memref<1x1x2x128xf32, #tpu.memory_space<vmem>>, vector<1x1x1x128xf32>
    %30 = vector.shape_cast %29 : vector<1x1x1x128xf32> to vector<1x128xf32>
    %31 = vector.shape_cast %28 : vector<1x128xf32> to vector<1x1x1x128xf32>
    tpu.vector_store %arg5[%c0_26, %c0_27, %c0_28, %c0_29], %31 {strides = array<i32>} : memref<1x1x2x128xf32, #tpu.memory_space<vmem>>, vector<1x1x1x128xf32>,
    %32 = arith.mulf %24, %24 : vector<16x128xf32>
    %cst_30 = arith.constant dense<0.000000e+00> : vector<128xf32>
    %33 = vector.multi_reduction <add>, %32, %cst_30 [0] : vector<16x128xf32> to vector<128xf32>
    %34 = vector.shape_cast %33 : vector<128xf32> to vector<1x128xf32>
    %c0_31 = arith.constant 0 : index
    %c0_32 = arith.constant 0 : index
    %c1_33 = arith.constant 1 : index
    %c0_34 = arith.constant 0 : index
    %35 = vector.load %arg5[%c0_31, %c0_32, %c1_33, %c0_34] : memref<1x1x2x128xf32, #tpu.memory_space<vmem>>, vector<1x1x1x128xf32>
    %36 = vector.shape_cast %35 : vector<1x1x1x128xf32> to vector<1x128xf32>
    %37 = vector.shape_cast %34 : vector<1x128xf32> to vector<1x1x1x128xf32>
    tpu.vector_store %arg5[%c0_31, %c0_32, %c1_33, %c0_34], %37 {strides = array<i32>} : memref<1x1x2x128xf32, #tpu.memory_space<vmem>>, vector<1x1x1x128xf32>,
    return
  }
  func.func @transform_0(%arg0: i32, %arg1: i32) -> (i32, i32, i32) {
    %c0_i32 = arith.constant 0 : i32
    %c0_i32_0 = arith.constant 0 : i32
    %c0_i32_1 = arith.constant 0 : i32
    return %arg0, %c0_i32, %c0_i32_0 : i32, i32, i32
  }
  func.func @transform_1(%arg0: i32, %arg1: i32) -> (i32, i32, i32) {
    %c0_i32 = arith.constant 0 : i32
    %c0_i32_0 = arith.constant 0 : i32
    %c0_i32_1 = arith.constant 0 : i32
    %c0_i32_2 = arith.constant 0 : i32
    return %c0_i32, %c0_i32_0, %c0_i32_1 : i32, i32, i32
  }
  func.func @transform_2(%arg0: i32, %arg1: i32) -> (i32, i32, i32) {
    %c0_i32 = arith.constant 0 : i32
    %c0_i32_0 = arith.constant 0 : i32
    return %arg0, %arg1, %c0_i32 : i32, i32, i32
  }
  func.func @transform_3(%arg0: i32, %arg1: i32) -> (i32, i32, i32, i32) {
    %c0_i32 = arith.constant 0 : i32
    %c0_i32_0 = arith.constant 0 : i32
    %c0_i32_1 = arith.constant 0 : i32
    return %arg0, %arg1, %c0_i32, %c0_i32_0 : i32, i32, i32, i32
  }
}

</mosaic_0001>

<llo_original>
// kernel: conv_bn_relu_drop.1
$region0: #{conv_bn_relu_drop.1}
  #allocation0 [shape = 'u32[]', space=smem, size = 0x4, offset = 0x4, fixed_abs, tag = 'smem constant byte address 0x4 - core index']
  #allocation1 [shape = 'u32[144,128]{1,0:T(1,128)}', space=vmem, size = 0x12000, scoped, tag = 'internal scratch']
  #allocation2 [shape = 'f32[16,128]{1,0:T(8,128)}', space=vmem, size = 0x2000, scoped, tag = 'scratch operand']
  %s0 = inlined_call_operand.vmem [shape: f32[2,18,128], index: 0, kind: input, shape index: {}]
  %s1 = inlined_call_operand.vmem [shape: f32[3,128,128], index: 1, kind: input, shape index: {}]
  %s2 = inlined_call_operand.vmem [shape: f32[2,16,128], index: 2, kind: output, shape index: {0}]
  %s3 = inlined_call_operand.vmem [shape: f32[2,1,2,128], index: 3, kind: output, shape index: {1}]
  %4 = xla_tuple %s2, %s3
  %s5 = sld [smem:[#allocation0]]
  $region49: #{conv_bn_relu_drop.1} parent=0
    _
  %s7 = ssub.s32 1, %s5
  %s8 = scalar_select 0, %s7, %s5
  loop: start=0, step=1, limit=4
  $region2: #{conv_bn_relu_drop.1} parent=0 // loop_pre_header
    _
  $region3: #{conv_bn_relu_drop.1} parent=0 // loop_header
    %s10 = sphi 0, %s14
    %p11 = scmp.ge.s32.totalorder %s10, 4
    %s17 = sphi 0, %s29
    %s18 = sphi 0, %s25
    %s19 = sphi 0, %s17
    %s20 = sphi 0, %s18
    %s21 = sphi 0, %s19
    %s22 = sphi 0, %s20
    %s32 = sphi 0, %s34
    %s35 = sphi 0, %s32
    %s36 = sphi 0, %s35
    %s52 = sphi 0, %s36
    %s56 = sphi 0, %s56
    %s58 = sphi 0, %s56
    %s59 = sphi 0, %s58
    %s73 = sphi 0, %s59
    %s81 = sphi 0, %s83
    %s84 = sphi 0, %s81
    %s85 = sphi 0, %s84
    %s101 = sphi 0, %s85
    %s109 = sphi 0, %s111
    %s112 = sphi 0, %s109
    %s113 = sphi 0, %s112
    %s129 = sphi 0, %s113
  $region4: #{conv_bn_relu_drop.1} parent=0 // loop_header_branch
    %13 = sbr.rel (%p11) target = $region8
  $region5: #{conv_bn_relu_drop.1} parent=0 // loop_body
    %s15 = ssub.s32 %s10, 1
    %s16 = ssub.s32 %s10, 2
    %s23 = sadd.s32 1, %s18
    %p24 = scmp.ge.s32.totalorder %s23, 1
    %s25 = scalar_select %p24, 0, %s23
    %s26 = sadd.s32 1, %s17
    %s27 = scalar_select %p24, %s26, %s17
    %p28 = scmp.ge.s32.totalorder %s27, 2
    %s29 = scalar_select %p28, 0, %s27
    %s30 = ssub.s32 %s17, %s29
    %p31 = scmp.eq.s32.totalorder %s30, 0
    %s33 = sadd.s32 %s32, 1
    %s34 = scalar_select %p31, %s32, %s33
    %p37 = pneg %p31
    %p38 = scmp.eq.s32.totalorder %s10, 1
    %p39 = por %p37, %p38
    %p40 = scmp.ne.s32.totalorder %s32, %s35
    %p41 = scmp.eq.s32.totalorder %s10, 0
    %p42 = por %p40, %p41
    %p43 = scmp.ne.s32.totalorder %s32, %s35
    %p44 = scmp.eq.s32.totalorder %s15, 1
    %p45 = por %p43, %p44
    %p46 = scmp.ne.s32.totalorder %s35, %s36
    %p47 = scmp.eq.s32.totalorder %s15, 0
    %p48 = por %p46, %p47
    %p49 = scmp.ne.s32.totalorder %s35, %s36
    %p50 = scmp.eq.s32.totalorder %s16, 1
    %p51 = por %p49, %p50
    %p53 = scmp.ne.s32.totalorder %s36, %s52
    %p54 = scmp.eq.s32.totalorder %s16, 0
    %p55 = por %p53, %p54
    %s57 = sadd.s32 %s56, 1
    %p60 = scmp.eq.s32.totalorder %s10, 1
    %p61 = scmp.ne.s32.totalorder %s56, %s58
    %p62 = scmp.eq.s32.totalorder %s10, 0
    %p63 = por %p61, %p62
    %p64 = scmp.ne.s32.totalorder %s56, %s58
    %p65 = scmp.eq.s32.totalorder %s15, 1
    %p66 = por %p64, %p65
    %p67 = scmp.ne.s32.totalorder %s58, %s59
    %p68 = scmp.eq.s32.totalorder %s15, 0
    %p69 = por %p67, %p68
    %p70 = scmp.ne.s32.totalorder %s58, %s59
    %p71 = scmp.eq.s32.totalorder %s16, 1
    %p72 = por %p70, %p71
    %p74 = scmp.ne.s32.totalorder %s59, %s73
    %p75 = scmp.eq.s32.totalorder %s16, 0
    %p76 = por %p74, %p75
    %s77 = ssub.s32 %s17, %s29
    %s78 = ssub.s32 %s18, %s25
    %s79 = sor.u32 %s77, %s78
    %p80 = scmp.eq.s32.totalorder %s79, 0
    %s82 = sadd.s32 %s81, 1
    %s83 = scalar_select %p80, %s81, %s82
    %p86 = pneg %p80
    %p87 = scmp.eq.s32.totalorder %s10, 1
    %p88 = por %p86, %p87
    %p89 = scmp.ne.s32.totalorder %s81, %s84
    %p90 = scmp.eq.s32.totalorder %s10, 0
    %p91 = por %p89, %p90
    %p92 = scmp.ne.s32.totalorder %s81, %s84
    %p93 = scmp.eq.s32.totalorder %s15, 1
    %p94 = por %p92, %p93
    %p95 = scmp.ne.s32.totalorder %s84, %s85
    %p96 = scmp.eq.s32.totalorder %s15, 0
    %p97 = por %p95, %p96
    %p98 = scmp.ne.s32.totalorder %s84, %s85
    %p99 = scmp.eq.s32.totalorder %s16, 1
    %p100 = por %p98, %p99
    %p102 = scmp.ne.s32.totalorder %s85, %s101
    %p103 = scmp.eq.s32.totalorder %s16, 0
    %p104 = por %p102, %p103
    %s105 = ssub.s32 %s17, %s29
    %s106 = ssub.s32 %s18, %s25
    %s107 = sor.u32 %s105, %s106
    %p108 = scmp.eq.s32.totalorder %s107, 0
    %s110 = sadd.s32 %s109, 1
    %s111 = scalar_select %p108, %s109, %s110
    %p114 = pneg %p108
    %p115 = scmp.eq.s32.totalorder %s10, 1
    %p116 = por %p114, %p115
    %p117 = scmp.ne.s32.totalorder %s109, %s112
    %p118 = scmp.eq.s32.totalorder %s10, 0
    %p119 = por %p117, %p118
    %p120 = scmp.ne.s32.totalorder %s109, %s112
    %p121 = scmp.eq.s32.totalorder %s15, 1
    %p122 = por %p120, %p121
    %p123 = scmp.ne.s32.totalorder %s112, %s113
    %p124 = scmp.eq.s32.totalorder %s15, 0
    %p125 = por %p123, %p124
    %p126 = scmp.ne.s32.totalorder %s112, %s113
    %p127 = scmp.eq.s32.totalorder %s16, 1
    %p128 = por %p126, %p127
    %p130 = scmp.ne.s32.totalorder %s113, %s129
    %p131 = scmp.eq.s32.totalorder %s16, 0
    %p132 = por %p130, %p131
    %p133 = scmp.le.s32.totalorder 1, %s10
    %p134 = scmp.lt.s32.totalorder %s10, 3
    %p135 = pnand %p133, %p134
    %p136 = pneg %p135
    // Predicated region
    $region9: #{conv_bn_relu_drop.1} parent=5 // pred_check
      _
    $region10: #{conv_bn_relu_drop.1} parent=5 // pred_check_branch
      %138 = sbr.rel (%p135) target = $region12
    $region11: #{conv_bn_relu_drop.1} parent=5 // pred_region
      %s139 = ssub.s32 %s10, 1
      // Predicated region
      $region13: #{conv_bn_relu_drop.1} parent=11 // pred_check
        %p140 = pneg %p69
      $region14: #{conv_bn_relu_drop.1} parent=11 // pred_check_branch
        %142 = sbr.rel (%p140) target = $region16
      $region15: #{conv_bn_relu_drop.1} parent=11 // pred_region
        _
      $region16: #{conv_bn_relu_drop.1} parent=11 // pred_fallthru
        _
    $region12: #{conv_bn_relu_drop.1} parent=5 // pred_fallthru
      _
    %p143 = scmp.lt.s32.totalorder %s10, 2
    // Predicated region
    $region17: #{conv_bn_relu_drop.1} parent=5 // pred_check
      %p144 = pneg %p143
    $region18: #{conv_bn_relu_drop.1} parent=5 // pred_check_branch
      %146 = sbr.rel (%p144) target = $region20
    $region19: #{conv_bn_relu_drop.1} parent=5 // pred_region
      // Predicated region
      $region21: #{conv_bn_relu_drop.1} parent=19 // pred_check
        %p147 = pneg %p42
      $region22: #{conv_bn_relu_drop.1} parent=19 // pred_check_branch
        %149 = sbr.rel (%p147) target = $region24
      $region23: #{conv_bn_relu_drop.1} parent=19 // pred_region
        %p150 = scmp.lt.s32.totalorder %s17, 1
        %s151 = scalar_select %p150, %s17, 1
        %s152 = smul.addr %s151, 3
        %s153 = smul.addr %s152, 8
        %s154 = scalar_lea.vmem %s0, %s153
      $region24: #{conv_bn_relu_drop.1} parent=19 // pred_fallthru
        _
    $region20: #{conv_bn_relu_drop.1} parent=5 // pred_fallthru
      _
    %p155 = scmp.le.s32.totalorder 1, %s10
    %p156 = scmp.lt.s32.totalorder %s10, 3
    %p157 = pnand %p155, %p156
    %p158 = pneg %p157
    // Predicated region
    $region25: #{conv_bn_relu_drop.1} parent=5 // pred_check
      _
    $region26: #{conv_bn_relu_drop.1} parent=5 // pred_check_branch
      %160 = sbr.rel (%p157) target = $region28
    $region27: #{conv_bn_relu_drop.1} parent=5 // pred_region
      %s161 = ssub.s32 %s10, 1
      %p162 = scmp.lt.s32.totalorder %s19, 1
      %s163 = scalar_select %p162, %s19, 1
      %s164 = smul.addr %s163, 3
      %s165 = smul.addr %s164, 8
      %s166 = scalar_lea.vmem %s0, %s165
      %p167 = pneg %p48
      %p168 = pneg %p45
      %p169 = pneg %p69
      %p170 = pneg %p66
      %p171 = pneg %p97
      %p172 = pneg %p94
      %s173 = smul.u32 2, %s20
      %p174 = scmp.lt.s32.totalorder %s19, 1
      %s175 = scalar_select %p174, %s19, 1
      %p176 = scmp.lt.s32.totalorder %s173, 1
      %s177 = scalar_select %p176, %s173, 1
      %s178 = smul.addr %s175, 2
      %s179 = sadd.s32 %s177, %s178
      %s180 = smul.addr %s179, 8
      %s181 = scalar_lea.vmem %s2, %s180
      %p182 = pneg %p125
      %p183 = pneg %p122
      %p184 = scmp.lt.s32.totalorder %s19, 1
      %s185 = scalar_select %p184, %s19, 1
      %p186 = scmp.lt.s32.totalorder %s20, 0
      %s187 = scalar_select %p186, %s20, 0
      %s188 = sadd.s32 %s187, %s185
      %s189 = smul.addr %s188, 2
      %s190 = scalar_lea.vmem %s3, %s189
      %p191 = scmp.lt.s32.totalorder %s19, 1
      %s192 = scalar_select %p191, %s19, 1
      %s193 = smul.addr %s192, 3
      %s194 = smul.addr %s193, 8
      %s195 = scalar_lea.vmem %s0, %s194
      %s196 = smul.u32 2, %s20
      %p197 = scmp.lt.s32.totalorder %s19, 1
      %s198 = scalar_select %p197, %s19, 1
      %p199 = scmp.lt.s32.totalorder %s196, 1
      %s200 = scalar_select %p199, %s196, 1
      %s201 = smul.addr %s198, 2
      %s202 = sadd.s32 %s200, %s201
      %s203 = smul.addr %s202, 8
      %s204 = scalar_lea.vmem %s2, %s203
      %s205 = smul.u32 2, %s20
      %p206 = scmp.lt.s32.totalorder %s19, 1
      %s207 = scalar_select %p206, %s19, 1
      %p208 = scmp.lt.s32.totalorder %s20, 0
      %s209 = scalar_select %p208, %s20, 0
      %s210 = sadd.s32 %s209, %s207
      %s211 = smul.addr %s210, 2
      %s212 = scalar_lea.vmem %s3, %s211
      %s213 = smul.u32 %s20, 16
      %s214 = scalar_lea.vmem %s195, %s213
      %v215 = vld [vmem:[%s214] sm:$0xff]
      %v216 = vld [vmem:[%s214 + $0x8] sm:$0xff]
      %v217 = vld [vmem:[%s214 + $0x10] sm:$0x3]
      %v218 = vld [vmem:[%s1] sm:$0xff]
      %v219 = vld [vmem:[%s1 + $0x8] sm:$0xff]
      %v220 = vld [vmem:[%s1 + $0x10] sm:$0xff]
      %v221 = vld [vmem:[%s1 + $0x18] sm:$0xff]
      %v222 = vld [vmem:[%s1 + $0x20] sm:$0xff]
      %v223 = vld [vmem:[%s1 + $0x28] sm:$0xff]
      %v224 = vld [vmem:[%s1 + $0x30] sm:$0xff]
      %v225 = vld [vmem:[%s1 + $0x38] sm:$0xff]
      %v226 = vld [vmem:[%s1 + $0x40] sm:$0xff]
      %v227 = vld [vmem:[%s1 + $0x48] sm:$0xff]
      %v228 = vld [vmem:[%s1 + $0x50] sm:$0xff]
      %v229 = vld [vmem:[%s1 + $0x58] sm:$0xff]
      %v230 = vld [vmem:[%s1 + $0x60] sm:$0xff]
      %v231 = vld [vmem:[%s1 + $0x68] sm:$0xff]
      %v232 = vld [vmem:[%s1 + $0x70] sm:$0xff]
      %v233 = vld [vmem:[%s1 + $0x78] sm:$0xff]
      %234 = vmatprep.subr.mxu0 0.0
      %235 = vmatpush1.msra.mxu0 %v233
      %236 = vmatprep.subr.mxu0 0.0
      %237 = vmatpush1.msra.mxu0 %v232
      %238 = vmatprep.subr.mxu0 0.0
      %239 = vmatpush1.msra.mxu0 %v231
      %240 = vmatprep.subr.mxu0 0.0
      %241 = vmatpush1.msra.mxu0 %v230
      %242 = vmatprep.subr.mxu0 0.0
      %243 = vmatpush1.msra.mxu0 %v229
      %244 = vmatprep.subr.mxu0 0.0
      %245 = vmatpush1.msra.mxu0 %v228
      %246 = vmatprep.subr.mxu0 0.0
      %247 = vmatpush1.msra.mxu0 %v227
      %248 = vmatprep.subr.mxu0 0.0
      %249 = vmatpush1.msra.mxu0 %v226
      %250 = vmatprep.subr.mxu0 0.0
      %251 = vmatpush1.msra.mxu0 %v225
      %252 = vmatprep.subr.mxu0 0.0
      %253 = vmatpush1.msra.mxu0 %v224
      %254 = vmatprep.subr.mxu0 0.0
      %255 = vmatpush1.msra.mxu0 %v223
      %256 = vmatprep.subr.mxu0 0.0
      %257 = vmatpush1.msra.mxu0 %v222
      %258 = vmatprep.subr.mxu0 0.0
      %259 = vmatpush1.msra.mxu0 %v221
      %260 = vmatprep.subr.mxu0 0.0
      %261 = vmatpush1.msra.mxu0 %v220
      %262 = vmatprep.subr.mxu0 0.0
      %263 = vmatpush1.msra.mxu0 %v219
      %264 = vmatprep.subr.mxu0 0.0
      %265 = vmatpush1.msra.mxu0 %v218
      %266 = vmatprep.subr.mxu0 0.0
      %267 = vmatpush2.msra.mxu0 0.0
      %268 = vmatprep.subr.mxu0 0.0
      %269 = vmatpush2.msra.mxu0 0.0
      %270 = vmatprep.subr.mxu0 0.0
      %271 = vmatpush2.msra.mxu0 0.0
      %272 = vmatprep.subr.mxu0 0.0
      %273 = vmatpush2.msra.mxu0 0.0
      %274 = vmatprep.subr.mxu0 0.0
      %275 = vmatpush2.msra.mxu0 0.0
      %276 = vmatprep.subr.mxu0 0.0
      %277 = vmatpush2.msra.mxu0 0.0
      %278 = vmatprep.subr.mxu0 0.0
      %279 = vmatpush2.msra.mxu0 0.0
      %280 = vmatprep.subr.mxu0 0.0
      %281 = vmatpush2.msra.mxu0 0.0
      %282 = vmatprep.subr.mxu0 0.0
      %283 = vmatpush2.msra.mxu0 0.0
      %284 = vmatprep.subr.mxu0 0.0
      %285 = vmatpush2.msra.mxu0 0.0
      %286 = vmatprep.subr.mxu0 0.0
      %287 = vmatpush2.msra.mxu0 0.0
      %288 = vmatprep.subr.mxu0 0.0
      %289 = vmatpush2.msra.mxu0 0.0
      %290 = vmatprep.subr.mxu0 0.0
      %291 = vmatpush2.msra.mxu0 0.0
      %292 = vmatprep.subr.mxu0 0.0
      %293 = vmatpush2.msra.mxu0 0.0
      %294 = vmatprep.subr.mxu0 0.0
      %295 = vmatpush2.msra.mxu0 0.0
      %296 = vmatprep.subr.mxu0 0.0
      %297 = vmatpush2.msra.mxu0 0.0
      %298 = vmatprep.mubr.f32.mxu0 0.0
      %299 = vmatmul.mubr.f32.gmra.mxu0 %v215
      %v300 = vpop.f32.mrf.mxu0
      %v301 = vadd.f32 0.0, %v300
      %v302 = vpop.f32.mrf.mxu0
      %303 = vmatprep.mubr.f32.mxu0 0.0
      %304 = vmatmul.mubr.f32.gmra.mxu0 %v216
      %v305 = vpop.f32.mrf.mxu0
      %v306 = vadd.f32 0.0, %v305
      %v307 = vpop.f32.mrf.mxu0
      %308 = vdwg.mxu0
      %309 = vst [vmem:[#allocation2] sm:$0xff] %v301
      %310 = vst [vmem:[#allocation2 + $0x8] sm:$0xff] %v306
      %v311 = vld [vmem:[#allocation2] sm:$0xff]
      %v312 = vld [vmem:[#allocation2 + $0x8] sm:$0xff]
      %s313 = scalar_lea.vmem %s1, 128
      %v314 = vld [vmem:[%s313] sm:$0xff]
      %v315 = vld [vmem:[%s313 + $0x8] sm:$0xff]
      %v316 = vld [vmem:[%s313 + $0x10] sm:$0xff]
      %v317 = vld [vmem:[%s313 + $0x18] sm:$0xff]
      %v318 = vld [vmem:[%s313 + $0x20] sm:$0xff]
      %v319 = vld [vmem:[%s313 + $0x28] sm:$0xff]
      %v320 = vld [vmem:[%s313 + $0x30] sm:$0xff]
      %v321 = vld [vmem:[%s313 + $0x38] sm:$0xff]
      %v322 = vld [vmem:[%s313 + $0x40] sm:$0xff]
      %v323 = vld [vmem:[%s313 + $0x48] sm:$0xff]
      %v324 = vld [vmem:[%s313 + $0x50] sm:$0xff]
      %v325 = vld [vmem:[%s313 + $0x58] sm:$0xff]
      %v326 = vld [vmem:[%s313 + $0x60] sm:$0xff]
      %v327 = vld [vmem:[%s313 + $0x68] sm:$0xff]
      %v328 = vld [vmem:[%s313 + $0x70] sm:$0xff]
      %v329 = vld [vmem:[%s313 + $0x78] sm:$0xff]
      %vm333 = vcmask 1046528
      %v334 = vrot.slane %v215, 1
      %v335 = vrot.slane %v216, 1
      %v336 = vsel %vm333, %v334, %v335
      %v337 = vrot.slane %v217, 1
      %v338 = vsel %vm333, %v335, %v337
      %341 = vmatprep.subr.mxu0 0.0
      %342 = vmatpush1.msra.mxu0 %v329
      %343 = vmatprep.subr.mxu0 0.0
      %344 = vmatpush1.msra.mxu0 %v328
      %345 = vmatprep.subr.mxu0 0.0
      %346 = vmatpush1.msra.mxu0 %v327
      %347 = vmatprep.subr.mxu0 0.0
      %348 = vmatpush1.msra.mxu0 %v326
      %349 = vmatprep.subr.mxu0 0.0
      %350 = vmatpush1.msra.mxu0 %v325
      %351 = vmatprep.subr.mxu0 0.0
      %352 = vmatpush1.msra.mxu0 %v324
      %353 = vmatprep.subr.mxu0 0.0
      %354 = vmatpush1.msra.mxu0 %v323
      %355 = vmatprep.subr.mxu0 0.0
      %356 = vmatpush1.msra.mxu0 %v322
      %357 = vmatprep.subr.mxu0 0.0
      %358 = vmatpush1.msra.mxu0 %v321
      %359 = vmatprep.subr.mxu0 0.0
      %360 = vmatpush1.msra.mxu0 %v320
      %361 = vmatprep.subr.mxu0 0.0
      %362 = vmatpush1.msra.mxu0 %v319
      %363 = vmatprep.subr.mxu0 0.0
      %364 = vmatpush1.msra.mxu0 %v318
      %365 = vmatprep.subr.mxu0 0.0
      %366 = vmatpush1.msra.mxu0 %v317
      %367 = vmatprep.subr.mxu0 0.0
      %368 = vmatpush1.msra.mxu0 %v316
      %369 = vmatprep.subr.mxu0 0.0
      %370 = vmatpush1.msra.mxu0 %v315
      %371 = vmatprep.subr.mxu0 0.0
      %372 = vmatpush1.msra.mxu0 %v314
      %373 = vmatprep.subr.mxu0 0.0
      %374 = vmatpush2.msra.mxu0 0.0
      %375 = vmatprep.subr.mxu0 0.0
      %376 = vmatpush2.msra.mxu0 0.0
      %377 = vmatprep.subr.mxu0 0.0
      %378 = vmatpush2.msra.mxu0 0.0
      %379 = vmatprep.subr.mxu0 0.0
      %380 = vmatpush2.msra.mxu0 0.0
      %381 = vmatprep.subr.mxu0 0.0
      %382 = vmatpush2.msra.mxu0 0.0
      %383 = vmatprep.subr.mxu0 0.0
      %384 = vmatpush2.msra.mxu0 0.0
      %385 = vmatprep.subr.mxu0 0.0
      %386 = vmatpush2.msra.mxu0 0.0
      %387 = vmatprep.subr.mxu0 0.0
      %388 = vmatpush2.msra.mxu0 0.0
      %389 = vmatprep.subr.mxu0 0.0
      %390 = vmatpush2.msra.mxu0 0.0
      %391 = vmatprep.subr.mxu0 0.0
      %392 = vmatpush2.msra.mxu0 0.0
      %393 = vmatprep.subr.mxu0 0.0
      %394 = vmatpush2.msra.mxu0 0.0
      %395 = vmatprep.subr.mxu0 0.0
      %396 = vmatpush2.msra.mxu0 0.0
      %397 = vmatprep.subr.mxu0 0.0
      %398 = vmatpush2.msra.mxu0 0.0
      %399 = vmatprep.subr.mxu0 0.0
      %400 = vmatpush2.msra.mxu0 0.0
      %401 = vmatprep.subr.mxu0 0.0
      %402 = vmatpush2.msra.mxu0 0.0
      %403 = vmatprep.subr.mxu0 0.0
      %404 = vmatpush2.msra.mxu0 0.0
      %405 = vmatprep.mubr.f32.mxu0 0.0
      %406 = vmatmul.mubr.f32.gmra.mxu0 %v336
      %v407 = vpop.f32.mrf.mxu0
      %v408 = vadd.f32 0.0, %v407
      %v409 = vpop.f32.mrf.mxu0
      %410 = vmatprep.mubr.f32.mxu0 0.0
      %411 = vmatmul.mubr.f32.gmra.mxu0 %v338
      %v412 = vpop.f32.mrf.mxu0
      %v413 = vadd.f32 0.0, %v412
      %v414 = vpop.f32.mrf.mxu0
      %415 = vdwg.mxu0
      %v416 = vadd.f32 %v311, %v408
      %v417 = vadd.f32 %v312, %v413
      %418 = vst [vmem:[#allocation2] sm:$0xff] %v416
      %419 = vst [vmem:[#allocation2 + $0x8] sm:$0xff] %v417
      %v420 = vld [vmem:[#allocation2] sm:$0xff]
      %v421 = vld [vmem:[#allocation2 + $0x8] sm:$0xff]
      %s422 = scalar_lea.vmem %s1, 256
      %v423 = vld [vmem:[%s422] sm:$0xff]
      %v424 = vld [vmem:[%s422 + $0x8] sm:$0xff]
      %v425 = vld [vmem:[%s422 + $0x10] sm:$0xff]
      %v426 = vld [vmem:[%s422 + $0x18] sm:$0xff]
      %v427 = vld [vmem:[%s422 + $0x20] sm:$0xff]
      %v428 = vld [vmem:[%s422 + $0x28] sm:$0xff]
      %v429 = vld [vmem:[%s422 + $0x30] sm:$0xff]
      %v430 = vld [vmem:[%s422 + $0x38] sm:$0xff]
      %v431 = vld [vmem:[%s422 + $0x40] sm:$0xff]
      %v432 = vld [vmem:[%s422 + $0x48] sm:$0xff]
      %v433 = vld [vmem:[%s422 + $0x50] sm:$0xff]
      %v434 = vld [vmem:[%s422 + $0x58] sm:$0xff]
      %v435 = vld [vmem:[%s422 + $0x60] sm:$0xff]
      %v436 = vld [vmem:[%s422 + $0x68] sm:$0xff]
      %v437 = vld [vmem:[%s422 + $0x70] sm:$0xff]
      %v438 = vld [vmem:[%s422 + $0x78] sm:$0xff]
      %vm439 = vcmask 1045504
      %v440 = vrot.slane %v215, 2
      %v441 = vrot.slane %v216, 2
      %v442 = vsel %vm439, %v440, %v441
      %v443 = vrot.slane %v217, 2
      %v444 = vsel %vm439, %v441, %v443
      %447 = vmatprep.subr.mxu0 0.0
      %448 = vmatpush1.msra.mxu0 %v438
      %449 = vmatprep.subr.mxu0 0.0
      %450 = vmatpush1.msra.mxu0 %v437
      %451 = vmatprep.subr.mxu0 0.0
      %452 = vmatpush1.msra.mxu0 %v436
      %453 = vmatprep.subr.mxu0 0.0
      %454 = vmatpush1.msra.mxu0 %v435
      %455 = vmatprep.subr.mxu0 0.0
      %456 = vmatpush1.msra.mxu0 %v434
      %457 = vmatprep.subr.mxu0 0.0
      %458 = vmatpush1.msra.mxu0 %v433
      %459 = vmatprep.subr.mxu0 0.0
      %460 = vmatpush1.msra.mxu0 %v432
      %461 = vmatprep.subr.mxu0 0.0
      %462 = vmatpush1.msra.mxu0 %v431
      %463 = vmatprep.subr.mxu0 0.0
      %464 = vmatpush1.msra.mxu0 %v430
      %465 = vmatprep.subr.mxu0 0.0
      %466 = vmatpush1.msra.mxu0 %v429
      %467 = vmatprep.subr.mxu0 0.0
      %468 = vmatpush1.msra.mxu0 %v428
      %469 = vmatprep.subr.mxu0 0.0
      %470 = vmatpush1.msra.mxu0 %v427
      %471 = vmatprep.subr.mxu0 0.0
      %472 = vmatpush1.msra.mxu0 %v426
      %473 = vmatprep.subr.mxu0 0.0
      %474 = vmatpush1.msra.mxu0 %v425
      %475 = vmatprep.subr.mxu0 0.0
      %476 = vmatpush1.msra.mxu0 %v424
      %477 = vmatprep.subr.mxu0 0.0
      %478 = vmatpush1.msra.mxu0 %v423
      %479 = vmatprep.subr.mxu0 0.0
      %480 = vmatpush2.msra.mxu0 0.0
      %481 = vmatprep.subr.mxu0 0.0
      %482 = vmatpush2.msra.mxu0 0.0
      %483 = vmatprep.subr.mxu0 0.0
      %484 = vmatpush2.msra.mxu0 0.0
      %485 = vmatprep.subr.mxu0 0.0
      %486 = vmatpush2.msra.mxu0 0.0
      %487 = vmatprep.subr.mxu0 0.0
      %488 = vmatpush2.msra.mxu0 0.0
      %489 = vmatprep.subr.mxu0 0.0
      %490 = vmatpush2.msra.mxu0 0.0
      %491 = vmatprep.subr.mxu0 0.0
      %492 = vmatpush2.msra.mxu0 0.0
      %493 = vmatprep.subr.mxu0 0.0
      %494 = vmatpush2.msra.mxu0 0.0
      %495 = vmatprep.subr.mxu0 0.0
      %496 = vmatpush2.msra.mxu0 0.0
      %497 = vmatprep.subr.mxu0 0.0
      %498 = vmatpush2.msra.mxu0 0.0
      %499 = vmatprep.subr.mxu0 0.0
      %500 = vmatpush2.msra.mxu0 0.0
      %501 = vmatprep.subr.mxu0 0.0
      %502 = vmatpush2.msra.mxu0 0.0
      %503 = vmatprep.subr.mxu0 0.0
      %504 = vmatpush2.msra.mxu0 0.0
      %505 = vmatprep.subr.mxu0 0.0
      %506 = vmatpush2.msra.mxu0 0.0
      %507 = vmatprep.subr.mxu0 0.0
      %508 = vmatpush2.msra.mxu0 0.0
      %509 = vmatprep.subr.mxu0 0.0
      %510 = vmatpush2.msra.mxu0 0.0
      %511 = vmatprep.mubr.f32.mxu0 0.0
      %512 = vmatmul.mubr.f32.gmra.mxu0 %v442
      %v513 = vpop.f32.mrf.mxu0
      %v514 = vadd.f32 0.0, %v513
      %v515 = vpop.f32.mrf.mxu0
      %516 = vmatprep.mubr.f32.mxu0 0.0
      %517 = vmatmul.mubr.f32.gmra.mxu0 %v444
      %v518 = vpop.f32.mrf.mxu0
      %v519 = vadd.f32 0.0, %v518
      %v520 = vpop.f32.mrf.mxu0
      %521 = vdwg.mxu0
      %v522 = vadd.f32 %v420, %v514
      %v523 = vadd.f32 %v421, %v519
      %524 = vst [vmem:[#allocation2] sm:$0xff] %v522
      %525 = vst [vmem:[#allocation2 + $0x8] sm:$0xff] %v523
      %v526 = vld [vmem:[#allocation2] sm:$0xff]
      %v527 = vld [vmem:[#allocation2 + $0x8] sm:$0xff]
      %528 = vst [vmem:[%s204] sm:$0xff] %v526
      %529 = vst [vmem:[%s204 + $0x8] sm:$0xff] %v527
      %v530 = vadd.f32 %v526, %v527
      %v531 = vrot.slane %v530, 4
      %v532 = vadd.f32 %v530, %v531
      %v533 = vrot.slane %v532, 2
      %v534 = vadd.f32 %v532, %v533
      %v535 = vrot.slane %v534, 1
      %v536 = vadd.f32 %v534, %v535
      %537 = vst [vmem:[%s212] sm:$0x1] %v536
      %v538 = vmul.f32 %v526, %v526
      %v539 = vmul.f32 %v527, %v527
      %v540 = vadd.f32 %v538, %v539
      %v541 = vrot.slane %v540, 4
      %v542 = vadd.f32 %v540, %v541
      %v543 = vrot.slane %v542, 2
      %v544 = vadd.f32 %v542, %v543
      %v545 = vrot.slane %v544, 1
      %v546 = vadd.f32 %v544, %v545
      %547 = vst [vmem:[%s212 + $0x1] sm:$0x1] %v546
      %s548 = smul.u32 2, %s20
      %p549 = scmp.lt.s32.totalorder %s19, 1
      %s550 = scalar_select %p549, %s19, 1
      %p551 = scmp.lt.s32.totalorder %s548, 1
      %s552 = scalar_select %p551, %s548, 1
      %s553 = smul.addr %s550, 2
      %s554 = sadd.s32 %s552, %s553
      %s555 = smul.addr %s554, 8
      %s556 = scalar_lea.vmem %s2, %s555
      %p557 = scmp.lt.s32.totalorder %s19, 1
      %s558 = scalar_select %p557, %s19, 1
      %p559 = scmp.lt.s32.totalorder %s20, 0
      %s560 = scalar_select %p559, %s20, 0
      %s561 = sadd.s32 %s560, %s558
      %s562 = smul.addr %s561, 2
      %s563 = scalar_lea.vmem %s3, %s562
      // Predicated region
      $region29: #{conv_bn_relu_drop.1} parent=27 // pred_check
        %p564 = pneg %p94
      $region30: #{conv_bn_relu_drop.1} parent=27 // pred_check_branch
        %566 = sbr.rel (%p564) target = $region32
      $region31: #{conv_bn_relu_drop.1} parent=27 // pred_region
        %s567 = smul.u32 2, %s20
      $region32: #{conv_bn_relu_drop.1} parent=27 // pred_fallthru
        _
      // Predicated region
      $region33: #{conv_bn_relu_drop.1} parent=27 // pred_check
        %p568 = pneg %p122
      $region34: #{conv_bn_relu_drop.1} parent=27 // pred_check_branch
        %570 = sbr.rel (%p568) target = $region36
      $region35: #{conv_bn_relu_drop.1} parent=27 // pred_region
        _
      $region36: #{conv_bn_relu_drop.1} parent=27 // pred_fallthru
        _
    $region28: #{conv_bn_relu_drop.1} parent=5 // pred_fallthru
      _
    %p571 = scmp.le.s32.totalorder 2, %s10
    // Predicated region
    $region37: #{conv_bn_relu_drop.1} parent=5 // pred_check
      %p572 = pneg %p571
    $region38: #{conv_bn_relu_drop.1} parent=5 // pred_check_branch
      %574 = sbr.rel (%p572) target = $region40
    $region39: #{conv_bn_relu_drop.1} parent=5 // pred_region
      %s575 = ssub.s32 %s10, 2
      // Predicated region
      $region41: #{conv_bn_relu_drop.1} parent=39 // pred_check
        %p576 = pneg %p100
      $region42: #{conv_bn_relu_drop.1} parent=39 // pred_check_branch
        %578 = sbr.rel (%p576) target = $region44
      $region43: #{conv_bn_relu_drop.1} parent=39 // pred_region
        %s579 = smul.u32 2, %s22
        %p580 = scmp.lt.s32.totalorder %s21, 1
        %s581 = scalar_select %p580, %s21, 1
        %p582 = scmp.lt.s32.totalorder %s579, 1
        %s583 = scalar_select %p582, %s579, 1
        %s584 = smul.addr %s581, 2
        %s585 = sadd.s32 %s583, %s584
        %s586 = smul.addr %s585, 8
        %s587 = scalar_lea.vmem %s2, %s586
      $region44: #{conv_bn_relu_drop.1} parent=39 // pred_fallthru
        _
      // Predicated region
      $region45: #{conv_bn_relu_drop.1} parent=39 // pred_check
        %p588 = pneg %p128
      $region46: #{conv_bn_relu_drop.1} parent=39 // pred_check_branch
        %590 = sbr.rel (%p588) target = $region48
      $region47: #{conv_bn_relu_drop.1} parent=39 // pred_region
        %p591 = scmp.lt.s32.totalorder %s21, 1
        %s592 = scalar_select %p591, %s21, 1
        %p593 = scmp.lt.s32.totalorder %s22, 0
        %s594 = scalar_select %p593, %s22, 0
        %s595 = sadd.s32 %s594, %s592
        %s596 = smul.addr %s595, 2
        %s597 = scalar_lea.vmem %s3, %s596
      $region48: #{conv_bn_relu_drop.1} parent=39 // pred_fallthru
        _
    $region40: #{conv_bn_relu_drop.1} parent=5 // pred_fallthru
      _
  $region6: #{conv_bn_relu_drop.1} parent=0 // loop_footer
    %s14 = sadd.s32 1, %s10
  $region7: #{conv_bn_relu_drop.1} parent=0 // loop_footer_branch
    %9 = sbr.rel target = $region3
  $region8: #{conv_bn_relu_drop.1} parent=0 // loop_exit
    _

</llo_original>
